<compile_context>
chip_gen: v7x
topology: tpu7x:2x2x1
jax: 0.10.0
libtpu: 0.0.40
codegen_flags: <defaults>
</compile_context>

<pallas_src>
import functools

import jax
import jax.numpy as jnp
from jax.experimental import pallas as pl
from jax.experimental.pallas import tpu as pltpu


def _round_up(x, m):
    return (x + m - 1) // m * m


def _bce_length_kernel(total_len_ref,          # SMEM (1,) int32 (scalar prefetch)
                       out_ref, lab_ref,       # VMEM (bB, bT) native dtype
                       len_ref,                # VMEM (bB, 1) int32
                       loss_ref,               # SMEM (1, 1) float32 output
                       acc_ref,                # VMEM (bB, bT) float32 scratch
                       *, block_t):
    bi = pl.program_id(0)
    ti = pl.program_id(1)
    nb = pl.num_programs(0)
    nt = pl.num_programs(1)

    @pl.when(jnp.logical_and(bi == 0, ti == 0))
    def _():
        loss_ref[0, 0] = jnp.float32(0.0)

    @pl.when(ti == 0)
    def _():
        acc_ref[...] = jnp.zeros_like(acc_ref)

    # Cast to f32 inside the kernel (inputs stream from HBM in native dtype).
    o = out_ref[...].astype(jnp.float32)
    y = lab_ref[...].astype(jnp.float32)
    loss = -(y * jnp.log(o) + (1.0 - y) * jnp.log(1.0 - o))

    # Per-row length mask via global column index for this T-tile.
    col = ti * block_t + jax.lax.broadcasted_iota(jnp.int32, loss.shape, 1)
    lens = len_ref[...]                         # (bB, 1) int32, broadcasts over T
    # jnp.where (not loss*mask): masked positions contribute exactly 0 even if
    # log() produced inf/NaN there (e.g. padded columns/rows).
    acc_ref[...] += jnp.where(col < lens, loss, 0.0)

    # One cross-lane reduce per B-tile (amortized over the whole T sweep).
    @pl.when(ti == nt - 1)
    def _():
        loss_ref[0, 0] += jnp.sum(acc_ref[...])

    # Finalize: divide by the pre-computed total length once, at the very end.
    @pl.when(jnp.logical_and(bi == nb - 1, ti == nt - 1))
    def _():
        loss_ref[0, 0] = loss_ref[0, 0] / total_len_ref[0].astype(jnp.float32)


def bce_loss_with_length(output, label, length, *, block_b=256, block_t=1024):
    """output, label: (B, T); length: (B,) int. Returns scalar float32."""
    assert output.shape == label.shape
    B, T = output.shape
    length = length.astype(jnp.int32)

    # Tile sizes: multiples of (8, 128); <= (256, 1024) -> 1 MiB/input buffer
    # at f32 (0.5 MiB at bf16), so 2 inputs x 2 pipeline buffers + scratch fit
    # comfortably under v7x's 32 MiB default scoped VMEM (and v5e's 16 MiB).
    bB = min(_round_up(B, 8), block_b)
    bT = min(_round_up(T, 128), block_t)
    Bp = _round_up(B, bB)
    Tp = _round_up(T, bT)

    # Pad with benign values; padded rows get length 0 and padded columns are
    # masked out by the per-row length, so they contribute nothing.
    out_p = jnp.pad(output, ((0, Bp - B), (0, Tp - T)), constant_values=0.5)
    lab_p = jnp.pad(label, ((0, Bp - B), (0, Tp - T)), constant_values=0.0)
    len_p = jnp.pad(length, (0, Bp - B)).reshape(Bp, 1)

    # Hoist sum(length) out of the per-element path (tiny reduce, done once).
    total_len = jnp.sum(length).reshape(1)

    nb = Bp // bB
    nt = Tp // bT

    kernel = functools.partial(_bce_length_kernel, block_t=bT)

    result = pl.pallas_call(
        kernel,
        out_shape=jax.ShapeDtypeStruct((1, 1), jnp.float32),
        grid_spec=pltpu.PrefetchScalarGridSpec(
            num_scalar_prefetch=1,
            grid=(nb, nt),                      # T (reduction) axis last
            in_specs=[
                pl.BlockSpec((bB, bT), lambda bi, ti, tl: (bi, ti)),
                pl.BlockSpec((bB, bT), lambda bi, ti, tl: (bi, ti)),
                pl.BlockSpec((bB, 1), lambda bi, ti, tl: (bi, 0)),
            ],
            out_specs=pl.BlockSpec(memory_space=pltpu.MemorySpace.SMEM),
            scratch_shapes=[pltpu.VMEM((bB, bT), jnp.float32)],
        ),
        compiler_params=pltpu.CompilerParams(
            # TODO(synk): on v7x, emit per-B-tile partial sums to a lane-dense
            # output (reduced by a tiny follow-up op) so the B axis can be
            # marked "parallel" and use both TensorCores.
            dimension_semantics=("arbitrary", "arbitrary"),
        ),
    )(total_len, out_p, lab_p, len_p)
    return result[0, 0]


if __name__ == "__main__":
    key = jax.random.PRNGKey(0)
    k1, k2, k3 = jax.random.split(key, 3)

    B, T = 4, 16
    # probabilities strictly in (0, 1) to keep log() finite (matches spec,
    # which has no clamping)
    output = jax.random.uniform(k1, (B, T), jnp.float32, minval=0.05, maxval=0.95)
    label = (jax.random.uniform(k2, (B, T), jnp.float32) > 0.5).astype(jnp.float32)
    length = jax.random.randint(k3, (B,), minval=1, maxval=T + 1, dtype=jnp.int32)

    loss = bce_loss_with_length(output, label, length)
    loss = jax.block_until_ready(loss)

    # Pure-JAX reference for sanity check
    col = jnp.arange(T)[None, :]
    mask = (col < length[:, None]).astype(jnp.float32)
    ref_loss = -(label * jnp.log(output) + (1 - label) * jnp.log(1 - output))
    ref = jnp.sum(ref_loss * mask) / jnp.sum(length).astype(jnp.float32)

    assert jnp.allclose(loss, ref, rtol=1e-5, atol=1e-6), (loss, ref)
    print("KERNEL_OK")
</pallas_src>

<mosaic_0001>
module attributes {stable_mosaic.version = 11 : i64} {
  func.func @_bce_length_kernel(%arg0: i32, %arg1: i32, %arg2: memref<1xi32, #tpu.memory_space<smem>>, %arg3: memref<8x128xf32, #tpu.memory_space<vmem>>, %arg4: memref<8x128xf32, #tpu.memory_space<vmem>>, %arg5: memref<8x1xi32, #tpu.memory_space<vmem>>, %arg6: memref<1x1xf32, #tpu.memory_space<smem>>, %arg7: memref<8x128xf32, #tpu.memory_space<vmem>>) attributes {dimension_semantics = [#tpu.dimension_semantics<arbitrary>, #tpu.dimension_semantics<arbitrary>], iteration_bounds = array<i64: 1, 1>, scalar_prefetch = 1 : i64, scratch_operands = 1 : i64, tpu.core_type = #tpu.core_type<tc>, window_params = [{transform_indices = @transform_0, window_bounds = array<i64: 8, 128>}, {transform_indices = @transform_1, window_bounds = array<i64: 8, 128>}, {transform_indices = @transform_2, window_bounds = array<i64: 8, 1>}, {transform_indices = @transform_3, window_bounds = array<i64: 1, 1>}]} {
    %c0_i32 = arith.constant 0 : i32
    %0 = arith.cmpi eq, %arg0, %c0_i32 : i32
    %c0_i32_0 = arith.constant 0 : i32
    %1 = arith.cmpi eq, %arg1, %c0_i32_0 : i32
    %2 = arith.andi %0, %1 : i1
    %3 = arith.extui %2 : i1 to i32
    %c0_i32_1 = arith.constant 0 : i32
    %4 = arith.cmpi ne, %3, %c0_i32_1 : i32
    scf.if %4 {
      %cst_21 = arith.constant 0.000000e+00 : f32
      %c0_22 = arith.constant 0 : index
      %c0_23 = arith.constant 0 : index
      %41 = memref.load %arg6[%c0_22, %c0_23] : memref<1x1xf32, #tpu.memory_space<smem>>
      memref.store %cst_21, %arg6[%c0_22, %c0_23] : memref<1x1xf32, #tpu.memory_space<smem>>
    } else {
    }
    %c0_i32_2 = arith.constant 0 : i32
    %5 = arith.cmpi eq, %arg1, %c0_i32_2 : i32
    %6 = arith.extui %5 : i1 to i32
    %c0_i32_3 = arith.constant 0 : i32
    %7 = arith.cmpi ne, %6, %c0_i32_3 : i32
    scf.if %7 {
      %cst_21 = arith.constant 0.000000e+00 : f32
      %41 = vector.broadcast %cst_21 : f32 to vector<8x128xf32>
      %c0_22 = arith.constant 0 : index
      %c0_23 = arith.constant 0 : index
      %42 = vector.load %arg7[%c0_22, %c0_23] : memref<8x128xf32, #tpu.memory_space<vmem>>, vector<8x128xf32>
      tpu.vector_store %arg7[%c0_22, %c0_23], %41 {strides = array<i32>} : memref<8x128xf32, #tpu.memory_space<vmem>>, vector<8x128xf32>,
    } else {
    }
    %c0 = arith.constant 0 : index
    %c0_4 = arith.constant 0 : index
    %8 = vector.load %arg3[%c0, %c0_4] : memref<8x128xf32, #tpu.memory_space<vmem>>, vector<8x128xf32>
    %c0_5 = arith.constant 0 : index
    %c0_6 = arith.constant 0 : index
    %9 = vector.load %arg4[%c0_5, %c0_6] : memref<8x128xf32, #tpu.memory_space<vmem>>, vector<8x128xf32>
    %10 = math.log %8 : vector<8x128xf32>
    %11 = arith.mulf %9, %10 : vector<8x128xf32>
    %cst = arith.constant 1.000000e+00 : f32
    %12 = vector.broadcast %cst : f32 to vector<8x128xf32>
    %13 = arith.subf %12, %9 : vector<8x128xf32>
    %cst_7 = arith.constant 1.000000e+00 : f32
    %14 = vector.broadcast %cst_7 : f32 to vector<8x128xf32>
    %15 = arith.subf %14, %8 : vector<8x128xf32>
    %16 = math.log %15 : vector<8x128xf32>
    %17 = arith.mulf %13, %16 : vector<8x128xf32>
    %18 = arith.addf %11, %17 : vector<8x128xf32>
    %cst_8 = arith.constant 0.000000e+00 : f32
    %19 = vector.broadcast %cst_8 : f32 to vector<8x128xf32>
    %20 = arith.subf %19, %18 : vector<8x128xf32>
    %c128_i32 = arith.constant 128 : i32
    %21 = arith.muli %arg1, %c128_i32 : i32
    %22 = tpu.iota {dimensions = array<i32: 1>} : vector<8x128xi32>
    %23 = vector.broadcast %21 : i32 to vector<8x128xi32>
    %24 = arith.addi %23, %22 : vector<8x128xi32>
    %c0_9 = arith.constant 0 : index
    %c0_10 = arith.constant 0 : index
    %25 = vector.load %arg5[%c0_9, %c0_10] : memref<8x1xi32, #tpu.memory_space<vmem>>, vector<8x1xi32>
    %c0_11 = arith.constant 0 : index
    %c0_12 = arith.constant 0 : index
    %26 = vector.load %arg7[%c0_11, %c0_12] : memref<8x128xf32, #tpu.memory_space<vmem>>, vector<8x128xf32>
    %27 = vector.broadcast %25 : vector<8x1xi32> to vector<8x128xi32>
    %28 = arith.cmpi slt, %24, %27 : vector<8x128xi32>
    %cst_13 = arith.constant 0.000000e+00 : f32
    %29 = vector.broadcast %cst_13 : f32 to vector<8x128xf32>
    %30 = arith.select %28, %20, %29 : vector<8x128xi1>, vector<8x128xf32>
    %31 = arith.addf %26, %30 : vector<8x128xf32>
    %c0_14 = arith.constant 0 : index
    %c0_15 = arith.constant 0 : index
    %32 = vector.load %arg7[%c0_14, %c0_15] : memref<8x128xf32, #tpu.memory_space<vmem>>, vector<8x128xf32>
    tpu.vector_store %arg7[%c0_14, %c0_15], %31 {strides = array<i32>} : memref<8x128xf32, #tpu.memory_space<vmem>>, vector<8x128xf32>,
    %c0_i32_16 = arith.constant 0 : i32
    %33 = arith.cmpi eq, %arg1, %c0_i32_16 : i32
    %34 = arith.extui %33 : i1 to i32
    %c0_i32_17 = arith.constant 0 : i32
    %35 = arith.cmpi ne, %34, %c0_i32_17 : i32
    scf.if %35 {
      %c0_21 = arith.constant 0 : index
      %c0_22 = arith.constant 0 : index
      %41 = memref.load %arg6[%c0_21, %c0_22] : memref<1x1xf32, #tpu.memory_space<smem>>
      %c0_23 = arith.constant 0 : index
      %c0_24 = arith.constant 0 : index
      %42 = vector.load %arg7[%c0_23, %c0_24] : memref<8x128xf32, #tpu.memory_space<vmem>>, vector<8x128xf32>
      %43 = vector.shape_cast %42 : vector<8x128xf32> to vector<1x8x128xf32>
      %cst_25 = arith.constant dense<0.000000e+00> : vector<1xf32>
      %44 = vector.multi_reduction <add>, %43, %cst_25 [1, 2] : vector<1x8x128xf32> to vector<1xf32>
      %45 = vector.shape_cast %44 : vector<1xf32> to vector<1x1x1xf32>
      %46 = vector.extract %45[0, 0, 0] : f32 from vector<1x1x1xf32>
      %47 = arith.addf %41, %46 : f32
      %c0_26 = arith.constant 0 : index
      %c0_27 = arith.constant 0 : index
      %48 = memref.load %arg6[%c0_26, %c0_27] : memref<1x1xf32, #tpu.memory_space<smem>>
      memref.store %47, %arg6[%c0_26, %c0_27] : memref<1x1xf32, #tpu.memory_space<smem>>
    } else {
    }
    %c0_i32_18 = arith.constant 0 : i32
    %36 = arith.cmpi eq, %arg0, %c0_i32_18 : i32
    %c0_i32_19 = arith.constant 0 : i32
    %37 = arith.cmpi eq, %arg1, %c0_i32_19 : i32
    %38 = arith.andi %36, %37 : i1
    %39 = arith.extui %38 : i1 to i32
    %c0_i32_20 = arith.constant 0 : i32
    %40 = arith.cmpi ne, %39, %c0_i32_20 : i32
    scf.if %40 {
      %c0_21 = arith.constant 0 : index
      %c0_22 = arith.constant 0 : index
      %41 = memref.load %arg6[%c0_21, %c0_22] : memref<1x1xf32, #tpu.memory_space<smem>>
      %c0_23 = arith.constant 0 : index
      %42 = memref.load %arg2[%c0_23] : memref<1xi32, #tpu.memory_space<smem>>
      %43 = arith.sitofp %42 : i32 to f32
      %44 = arith.divf %41, %43 : f32
      %c0_24 = arith.constant 0 : index
      %c0_25 = arith.constant 0 : index
      %45 = memref.load %arg6[%c0_24, %c0_25] : memref<1x1xf32, #tpu.memory_space<smem>>
      memref.store %44, %arg6[%c0_24, %c0_25] : memref<1x1xf32, #tpu.memory_space<smem>>
    } else {
    }
    return
  }
  func.func @transform_0(%arg0: i32, %arg1: i32, %arg2: memref<1xi32, #tpu.memory_space<smem>>) -> (i32, i32) {
    %c0_i32 = arith.constant 0 : i32
    return %arg0, %arg1 : i32, i32
  }
  func.func @transform_1(%arg0: i32, %arg1: i32, %arg2: memref<1xi32, #tpu.memory_space<smem>>) -> (i32, i32) {
    %c0_i32 = arith.constant 0 : i32
    return %arg0, %arg1 : i32, i32
  }
  func.func @transform_2(%arg0: i32, %arg1: i32, %arg2: memref<1xi32, #tpu.memory_space<smem>>) -> (i32, i32) {
    %c0_i32 = arith.constant 0 : i32
    %c0_i32_0 = arith.constant 0 : i32
    return %arg0, %c0_i32 : i32, i32
  }
  func.func @transform_3(%arg0: i32, %arg1: i32, %arg2: memref<1xi32, #tpu.memory_space<smem>>) -> (i32, i32) {
    %c0_i32 = arith.constant 0 : i32
    %c0_i32_0 = arith.constant 0 : i32
    %c0_i32_1 = arith.constant 0 : i32
    return %c0_i32, %c0_i32_0 : i32, i32
  }
}

</mosaic_0001>

<llo_original>
// kernel: tpu_custom_call.1
$region0: #{tpu_custom_call.1}
  #allocation0 [shape = 'u32[]', space=smem, size = 0x4, offset = 0x4, fixed_abs, tag = 'smem constant byte address 0x4 - core index']
  #allocation1 [shape = 'u32[144,128]{1,0:T(1,128)}', space=vmem, size = 0x12000, scoped, tag = 'internal scratch']
  #allocation2 [shape = 'f32[8,128]{1,0:T(8,128)}', space=vmem, size = 0x1000, scoped, tag = 'scratch operand']
  #allocation3 [shape = 's32[1]{0}', space=sflag, size = 0x4, scoped, tag = 'scoped memory for tpu_custom_call.1']
  #allocation4 [shape = 's32[1]{0:T(128)S(6)}', space=smem, size = 0x200, scoped, tag = 'prefetched SMEM operand 0']
  %s0 = inlined_call_operand.<no memory space> [shape: s32[1], index: 0, kind: input, shape index: {}]
  %s1 = inlined_call_operand.vmem [shape: f32[8,128], index: 1, kind: input, shape index: {}]
  %s2 = inlined_call_operand.vmem [shape: f32[8,128], index: 2, kind: input, shape index: {}]
  %s3 = inlined_call_operand.vmem [shape: s32[8,1], index: 3, kind: input, shape index: {}]
  %s4 = inlined_call_operand.hbm [shape: f32[1,1], index: 4, kind: output, shape index: {}]
  %s5 = sld [smem:[#allocation0]]
  $region38: #{tpu_custom_call.1} parent=0
    _
  %s7 = ssub.s32 1, %s5
  %s8 = scalar_select 0, %s7, %s5
  %9 = sst [smem:[#allocation4]] %s0
  $region1: #{tpu_custom_call.1} parent=0
    #allocation5 [shape = 'u8[512]{0}', space=smem, size = 0x200, scoped, tag = 'output window, operand 0, single buffered']
    #allocation6 [shape = 's32[1]{0}', space=sflag, size = 0x4, scoped, tag = 'scoped memory for tpu_custom_call.1']
    %10 = vsyncpa [#allocation6], 0
    // Predicated region
    $region2: #{tpu_custom_call.1} parent=1 // pred_check
      _
    $region3: #{tpu_custom_call.1} parent=1 // pred_check_branch
      %12 = sbr.rel (0) target = $region5
    $region4: #{tpu_custom_call.1} parent=1 // pred_region
      _
    $region5: #{tpu_custom_call.1} parent=1 // pred_fallthru
      _
    // Predicated region
    $region6: #{tpu_custom_call.1} parent=1 // pred_check
      _
    $region7: #{tpu_custom_call.1} parent=1 // pred_check_branch
      %14 = sbr.rel (0) target = $region9
    $region8: #{tpu_custom_call.1} parent=1 // pred_region
      _
    $region9: #{tpu_custom_call.1} parent=1 // pred_fallthru
      _
    // Predicated region
    $region10: #{tpu_custom_call.1} parent=1 // pred_check
      _
    $region11: #{tpu_custom_call.1} parent=1 // pred_check_branch
      %16 = sbr.rel (0) target = $region13
    $region12: #{tpu_custom_call.1} parent=1 // pred_region
      _
    $region13: #{tpu_custom_call.1} parent=1 // pred_fallthru
      _
    %p17 = scmp.eq.s32.totalorder 0, 0
    %p18 = scmp.eq.s32.totalorder 0, 0
    %p19 = pnand %p17, %p18
    %p20 = pneg %p19
    // Predicated region
    $region14: #{tpu_custom_call.1} parent=1 // pred_check
      _
    $region15: #{tpu_custom_call.1} parent=1 // pred_check_branch
      %22 = sbr.rel (%p19) target = $region17
    $region16: #{tpu_custom_call.1} parent=1 // pred_region
      %s23 = scalar_lea.smem [#allocation5], 0
      %24 = sst [smem:[%s23]] 0.0
    $region17: #{tpu_custom_call.1} parent=1 // pred_fallthru
      _
    // Predicated region
    $region18: #{tpu_custom_call.1} parent=1 // pred_check
      %p25 = pneg %p18
    $region19: #{tpu_custom_call.1} parent=1 // pred_check_branch
      %27 = sbr.rel (%p25) target = $region21
    $region20: #{tpu_custom_call.1} parent=1 // pred_region
      %28 = vst [vmem:[#allocation2] sm:$0xff] 0.0
    $region21: #{tpu_custom_call.1} parent=1 // pred_fallthru
      _
    %v29 = vld [vmem:[%s1] sm:$0xff]
    %v30 = vld [vmem:[%s2] sm:$0xff]
    %v31 = vlog2.pop %v29
    %v32 = vmul.f32 %v31, 0.6931472
    %v33 = vmul.f32 %v30, %v32
    %v34 = vsub.f32 1.0, %v30
    %v35 = vsub.f32 1.0, %v29
    %v36 = vlog2.pop %v35
    %v37 = vmul.f32 %v36, 0.6931472
    %v38 = vmul.f32 %v34, %v37
    %v39 = vadd.f32 %v33, %v38
    %v40 = vsub.f32 0.0, %v39
    %s41 = smul.u32 0, 128
    %v42 = vlaneseq
    %v43 = vand.u32 %v42, 127
    %v44 = vstv %s41
    %v45 = vadd.s32 %v44, %v43
    %v46 = vld [vmem:[%s3] sm:$0xff]
    %v47 = vld [vmem:[#allocation2] sm:$0xff]
    %48 = vset.pattern.permute.xlu0 0
    %49 = vperm.xlu0 %48, %v46
    %v50 = vpop.permute.xlu0 %49
    %vm51 = vcmp.lt.s32.totalorder %v45, %v50
    %v52 = vsel %vm51, %v40, 0.0
    %v53 = vadd.f32 %v47, %v52
    %54 = vst [vmem:[#allocation2] sm:$0xff] %v53
    // Predicated region
    $region22: #{tpu_custom_call.1} parent=1 // pred_check
      %p55 = pneg %p18
    $region23: #{tpu_custom_call.1} parent=1 // pred_check_branch
      %57 = sbr.rel (%p55) target = $region25
    $region24: #{tpu_custom_call.1} parent=1 // pred_region
      %s58 = sld [smem:[#allocation5]]
      %v59 = vld [vmem:[#allocation2] sm:$0xff]
      %60 = vadd.xlane.f32.xlu0 %v59
      %v61 = vpop.xlane.xlu0 %60
      %v62 = vrot.slane %v61, 4
      %v63 = vadd.f32 %v61, %v62
      %v64 = vrot.slane %v63, 2
      %v65 = vadd.f32 %v63, %v64
      %v66 = vrot.slane %v65, 1
      %v67 = vadd.f32 %v65, %v66
      %s68 = vtos %v67
      %s69 = sadd.f32 %s58, %s68
      %s70 = scalar_lea.smem [#allocation5], 0
      %71 = sst [smem:[%s70]] %s69
    $region25: #{tpu_custom_call.1} parent=1 // pred_fallthru
      _
    // Predicated region
    $region26: #{tpu_custom_call.1} parent=1 // pred_check
      _
    $region27: #{tpu_custom_call.1} parent=1 // pred_check_branch
      %73 = sbr.rel (%p19) target = $region29
    $region28: #{tpu_custom_call.1} parent=1 // pred_region
      %s74 = sld [smem:[#allocation5]]
      %s75 = sld [smem:[#allocation4]]
      %s76 = scvt.s32.f32 %s75
      %v77 = vstv %s76
      %v78 = vrcp.pop %v77
      %s79 = vtos %v78
      %s80 = smul.f32 %s74, %s79
      %s81 = scalar_lea.smem [#allocation5], 0
      %82 = sst [smem:[%s81]] %s80
    $region29: #{tpu_custom_call.1} parent=1 // pred_fallthru
      _
    // Predicated region
    $region30: #{tpu_custom_call.1} parent=1 // pred_check
      _
    $region31: #{tpu_custom_call.1} parent=1 // pred_check_branch
      %84 = sbr.rel (0) target = $region33
    $region32: #{tpu_custom_call.1} parent=1 // pred_region
      %s86 = ssub.s32 16, 16
      %87 = vsyncadd [#allocation6], %s86
      %90 = dma.smem_to_hbm [#allocation5], 16, %s4, [#allocation6]
    $region33: #{tpu_custom_call.1} parent=1 // pred_fallthru
      _
    // Predicated region
    $region34: #{tpu_custom_call.1} parent=1 // pred_check
      _
    $region35: #{tpu_custom_call.1} parent=1 // pred_check_branch
      %92 = sbr.rel (0) target = $region37
    $region36: #{tpu_custom_call.1} parent=1 // pred_region
      %93 = dma.done [#allocation6], 16
    $region37: #{tpu_custom_call.1} parent=1 // pred_fallthru
      _
    %94 = sfence
    %95 = vsyncpa [#allocation6], 1

</llo_original>
